<compile_context>
chip_gen: v6e
topology: v6e:2x2x1
jax: 0.10.0
libtpu: 0.0.40
codegen_flags: <defaults>
</compile_context>

<pallas_src>
import functools

import jax
import jax.numpy as jnp
import numpy as np
from jax import lax
from jax.experimental import pallas as pl
from jax.experimental.pallas import tpu as pltpu


def _round_up(a: int, b: int) -> int:
    return (a + b - 1) // b * b


def _patch_embed_kernel(x_ref, w_ref, b_ref, o_ref):
    """One grid step == one (TM, K) slab of flattened patches.

    x_ref : VMEM (TM, K)   flattened patches (im2col rows)
    w_ref : VMEM (K, E)    flattened conv weight (shared across grid steps)
    b_ref : VMEM (1, E)    bias row (shared)
    o_ref : VMEM (TM, E)   projected patch embeddings
    """
    acc = jnp.dot(x_ref[...], w_ref[...], preferred_element_type=jnp.float32)
    o_ref[...] = (acc + b_ref[...].astype(jnp.float32)).astype(o_ref.dtype)


def patch_embedding_flatten(x, weight, bias, patch_size, *, tm=256):
    """JAX/Pallas equivalent of PatchEmbedding_Flatten.forward.

    x      : (B, C, H, W)
    weight : (E, C, p, p)   Conv2d weight (OIHW)
    bias   : (E,)           Conv2d bias
    returns: (B, (H//p)*(W//p), E)
    """
    B, C, H, W = x.shape
    E = weight.shape[0]
    p = patch_size
    gh, gw = H // p, W // p
    num_patches = gh * gw
    K = C * p * p
    M = B * num_patches

    # --- layout plumbing in plain JAX (no compute): im2col + weight flatten ---
    # Patch flattening order (c, ph, pw) matches Conv2d's OIHW weight layout.
    xp = x.reshape(B, C, gh, p, gw, p)
    xp = xp.transpose(0, 2, 4, 1, 3, 5)          # (B, gh, gw, C, p, p)
    xp = xp.reshape(M, K)                        # (B*num_patches, C*p*p)
    w_flat = weight.reshape(E, K).T              # (K, E)
    b_row = bias.reshape(1, E)

    # Pick the M tile: big (amortize per-step overhead), sublane-aligned, and
    # pad M so there are no partial blocks.
    tm_eff = min(tm, _round_up(M, 8))
    m_pad = _round_up(M, tm_eff)
    if m_pad != M:
        xp = jnp.pad(xp, ((0, m_pad - M), (0, 0)))

    out = pl.pallas_call(
        _patch_embed_kernel,
        out_shape=jax.ShapeDtypeStruct((m_pad, E), x.dtype),
        grid=(m_pad // tm_eff,),
        in_specs=[
            pl.BlockSpec((tm_eff, K), lambda i: (i, 0)),   # patch rows (tiled)
            pl.BlockSpec((K, E), lambda i: (0, 0)),        # weight (resident)
            pl.BlockSpec((1, E), lambda i: (0, 0)),        # bias   (resident)
        ],
        out_specs=pl.BlockSpec((tm_eff, E), lambda i: (i, 0)),
        compiler_params=pltpu.CompilerParams(
            dimension_semantics=("parallel",)),
    )(xp, w_flat, b_row)

    return out[:M].reshape(B, num_patches, E)


if __name__ == "__main__":
    # Small shapes consistent with the module: B=2, C=4, 16x16 image,
    # patch_size=4 -> 16 patches, emb_size=32.
    B, C, H, W = 2, 4, 16, 16
    patch_size = 4
    emb_size = 32

    key = jax.random.PRNGKey(0)
    kx, kw, kb = jax.random.split(key, 3)
    x = jax.random.normal(kx, (B, C, H, W), dtype=jnp.float32)
    weight = jax.random.normal(
        kw, (emb_size, C, patch_size, patch_size), dtype=jnp.float32) * 0.1
    bias = jax.random.normal(kb, (emb_size,), dtype=jnp.float32)

    out = patch_embedding_flatten(x, weight, bias, patch_size)
    jax.block_until_ready(out)

    # --- independent reference: XLA conv + permute + reshape (the torch spec) ---
    conv = lax.conv_general_dilated(
        x, weight, window_strides=(patch_size, patch_size), padding="VALID",
        dimension_numbers=("NCHW", "OIHW", "NCHW"))
    conv = conv + bias[None, :, None, None]
    ref = jnp.transpose(conv, (0, 2, 3, 1)).reshape(B, -1, emb_size)

    np.testing.assert_allclose(np.asarray(out), np.asarray(ref),
                               rtol=1e-3, atol=1e-3)
    assert out.shape == (B, (H // patch_size) * (W // patch_size), emb_size)

    print("KERNEL_OK")
</pallas_src>

<mosaic_0001>
module attributes {stable_mosaic.version = 11 : i64} {
  func.func @_patch_embed_kernel(%arg0: i32, %arg1: memref<32x64xf32, #tpu.memory_space<vmem>>, %arg2: memref<64x32xf32, #tpu.memory_space<vmem>>, %arg3: memref<1x32xf32, #tpu.memory_space<vmem>>, %arg4: memref<32x32xf32, #tpu.memory_space<vmem>>) attributes {dimension_semantics = [#tpu.dimension_semantics<parallel>], iteration_bounds = array<i64: 1>, scalar_prefetch = 0 : i64, scratch_operands = 0 : i64, tpu.core_type = #tpu.core_type<tc>, window_params = [{transform_indices = @transform_0, window_bounds = array<i64: 32, 64>}, {pipeline_mode = #tpu.pipeline_mode<synchronous>, transform_indices = @transform_1, window_bounds = array<i64: 64, 32>}, {pipeline_mode = #tpu.pipeline_mode<synchronous>, transform_indices = @transform_2, window_bounds = array<i64: 1, 32>}, {transform_indices = @transform_3, window_bounds = array<i64: 32, 32>}]} {
    %c0 = arith.constant 0 : index
    %c0_0 = arith.constant 0 : index
    %0 = vector.load %arg1[%c0, %c0_0] : memref<32x64xf32, #tpu.memory_space<vmem>>, vector<32x64xf32>
    %c0_1 = arith.constant 0 : index
    %c0_2 = arith.constant 0 : index
    %1 = vector.load %arg2[%c0_1, %c0_2] : memref<64x32xf32, #tpu.memory_space<vmem>>, vector<64x32xf32>
    %cst = arith.constant dense<0.000000e+00> : vector<32x32xf32>
    %2 = tpu.matmul %0, %1, %cst {dimension_numbers = #tpu.dot_dimension_numbers<[1], [0], [0], [1], [0, 0, 1, 1], [], []>} : vector<32x64xf32>, vector<64x32xf32>, vector<32x32xf32> -> vector<32x32xf32>
    %c0_3 = arith.constant 0 : index
    %c0_4 = arith.constant 0 : index
    %3 = vector.load %arg3[%c0_3, %c0_4] : memref<1x32xf32, #tpu.memory_space<vmem>>, vector<1x32xf32>
    %4 = vector.broadcast %3 : vector<1x32xf32> to vector<32x32xf32>
    %5 = arith.addf %2, %4 : vector<32x32xf32>
    %c0_5 = arith.constant 0 : index
    %c0_6 = arith.constant 0 : index
    %6 = vector.load %arg4[%c0_5, %c0_6] : memref<32x32xf32, #tpu.memory_space<vmem>>, vector<32x32xf32>
    tpu.vector_store %arg4[%c0_5, %c0_6], %5 {strides = array<i32>} : memref<32x32xf32, #tpu.memory_space<vmem>>, vector<32x32xf32>,
    return
  }
  func.func @transform_0(%arg0: i32) -> (i32, i32) {
    %c0_i32 = arith.constant 0 : i32
    %c0_i32_0 = arith.constant 0 : i32
    return %arg0, %c0_i32 : i32, i32
  }
  func.func @transform_1(%arg0: i32) -> (i32, i32) {
    %c0_i32 = arith.constant 0 : i32
    %c0_i32_0 = arith.constant 0 : i32
    %c0_i32_1 = arith.constant 0 : i32
    return %c0_i32, %c0_i32_0 : i32, i32
  }
  func.func @transform_2(%arg0: i32) -> (i32, i32) {
    %c0_i32 = arith.constant 0 : i32
    %c0_i32_0 = arith.constant 0 : i32
    %c0_i32_1 = arith.constant 0 : i32
    return %c0_i32, %c0_i32_0 : i32, i32
  }
  func.func @transform_3(%arg0: i32) -> (i32, i32) {
    %c0_i32 = arith.constant 0 : i32
    %c0_i32_0 = arith.constant 0 : i32
    return %arg0, %c0_i32 : i32, i32
  }
}

</mosaic_0001>

<llo_original>
// kernel: tpu_custom_call.1
$region0: #{tpu_custom_call.1}
  #allocation0 [shape = 'u32[]', space=smem, size = 0x4, offset = 0x4, fixed_abs, tag = 'smem constant byte address 0x4 - core index']
  #allocation1 [shape = 'u32[144,128]{1,0:T(1,128)}', space=vmem, size = 0x12000, scoped, tag = 'internal scratch']
  %s0 = inlined_call_operand.vmem [shape: f32[32,64], index: 0, kind: input, shape index: {}]
  %s1 = inlined_call_operand.vmem [shape: f32[64,32], index: 1, kind: input, shape index: {}]
  %s2 = inlined_call_operand.vmem [shape: f32[1,32], index: 2, kind: input, shape index: {}]
  %s3 = inlined_call_operand.hbm [shape: f32[32,32], index: 3, kind: output, shape index: {}]
  %s4 = sld [smem:[#allocation0]]
  $region22: #{tpu_custom_call.1} parent=0
    _
  %s6 = ssub.s32 1, %s4
  %s7 = scalar_select 0, %s6, %s4
  $region1: #{tpu_custom_call.1} parent=0
    #allocation2 [shape = 'u8[16384]{0}', space=vmem, size = 0x4000, scoped, tag = 'output window, operand 0, single buffered']
    #allocation3 [shape = 's32[1]{0}', space=sflag, size = 0x4, scoped, tag = 'scoped memory for tpu_custom_call.1']
    %8 = vsyncpa [#allocation3], 0
    // Predicated region
    $region2: #{tpu_custom_call.1} parent=1 // pred_check
      _
    $region3: #{tpu_custom_call.1} parent=1 // pred_check_branch
      %10 = sbr.rel (0) target = $region5
    $region4: #{tpu_custom_call.1} parent=1 // pred_region
      _
    $region5: #{tpu_custom_call.1} parent=1 // pred_fallthru
      _
    // Predicated region
    $region6: #{tpu_custom_call.1} parent=1 // pred_check
      _
    $region7: #{tpu_custom_call.1} parent=1 // pred_check_branch
      %12 = sbr.rel (0) target = $region9
    $region8: #{tpu_custom_call.1} parent=1 // pred_region
      _
    $region9: #{tpu_custom_call.1} parent=1 // pred_fallthru
      _
    // Predicated region
    $region10: #{tpu_custom_call.1} parent=1 // pred_check
      _
    $region11: #{tpu_custom_call.1} parent=1 // pred_check_branch
      %14 = sbr.rel (0) target = $region13
    $region12: #{tpu_custom_call.1} parent=1 // pred_region
      _
    $region13: #{tpu_custom_call.1} parent=1 // pred_fallthru
      _
    %v15 = vld [vmem:[%s0] sm:$0xff]
    %v16 = vld [vmem:[%s0 + $0x8] sm:$0xff]
    %v17 = vld [vmem:[%s0 + $0x10] sm:$0xff]
    %v18 = vld [vmem:[%s0 + $0x18] sm:$0xff]
    %v19 = vld [vmem:[%s1] sm:$0xff]
    %v20 = vld [vmem:[%s1 + $0x8] sm:$0xff]
    %v21 = vld [vmem:[%s1 + $0x10] sm:$0xff]
    %v22 = vld [vmem:[%s1 + $0x18] sm:$0xff]
    %v23 = vld [vmem:[%s1 + $0x20] sm:$0xff]
    %v24 = vld [vmem:[%s1 + $0x28] sm:$0xff]
    %v25 = vld [vmem:[%s1 + $0x30] sm:$0xff]
    %v26 = vld [vmem:[%s1 + $0x38] sm:$0xff]
    %v27 = vld [vmem:[%s2] sm:$0x1]
    %v29 = vlaneseq
    %v30 = vshrl.u32 %v29, 7
    %v31 = vsub.s32 0, %v30
    %v32 = vrot.slane %v27, %v31
    %vm34 = vcmask 523264
    %v36 = vsel %vm34, %v15, 0
    %v39 = vsel %vm34, %v16, 0
    %v42 = vsel %vm34, %v17, 0
    %v45 = vsel %vm34, %v18, 0
    %47 = vmatprep.subr.mxu0 0.0
    %48 = vmatpush1.msra.mxu0 0.0
    %49 = vmatprep.subr.mxu0 0.0
    %50 = vmatpush1.msra.mxu0 0.0
    %51 = vmatprep.subr.mxu0 0.0
    %52 = vmatpush1.msra.mxu0 0.0
    %53 = vmatprep.subr.mxu0 0.0
    %54 = vmatpush1.msra.mxu0 0.0
    %55 = vmatprep.subr.mxu0 0.0
    %56 = vmatpush1.msra.mxu0 0.0
    %57 = vmatprep.subr.mxu0 0.0
    %58 = vmatpush1.msra.mxu0 0.0
    %59 = vmatprep.subr.mxu0 0.0
    %60 = vmatpush1.msra.mxu0 0.0
    %61 = vmatprep.subr.mxu0 0.0
    %62 = vmatpush1.msra.mxu0 0.0
    %63 = vmatprep.subr.mxu0 0.0
    %64 = vmatpush1.msra.mxu0 %v26
    %65 = vmatprep.subr.mxu0 0.0
    %66 = vmatpush1.msra.mxu0 %v25
    %67 = vmatprep.subr.mxu0 0.0
    %68 = vmatpush1.msra.mxu0 %v24
    %69 = vmatprep.subr.mxu0 0.0
    %70 = vmatpush1.msra.mxu0 %v23
    %71 = vmatprep.subr.mxu0 0.0
    %72 = vmatpush1.msra.mxu0 %v22
    %73 = vmatprep.subr.mxu0 0.0
    %74 = vmatpush1.msra.mxu0 %v21
    %75 = vmatprep.subr.mxu0 0.0
    %76 = vmatpush1.msra.mxu0 %v20
    %77 = vmatprep.subr.mxu0 0.0
    %78 = vmatpush1.msra.mxu0 %v19
    %79 = vmatprep.subr.mxu0 0.0
    %80 = vmatpush2.msra.mxu0 0.0
    %81 = vmatprep.subr.mxu0 0.0
    %82 = vmatpush2.msra.mxu0 0.0
    %83 = vmatprep.subr.mxu0 0.0
    %84 = vmatpush2.msra.mxu0 0.0
    %85 = vmatprep.subr.mxu0 0.0
    %86 = vmatpush2.msra.mxu0 0.0
    %87 = vmatprep.subr.mxu0 0.0
    %88 = vmatpush2.msra.mxu0 0.0
    %89 = vmatprep.subr.mxu0 0.0
    %90 = vmatpush2.msra.mxu0 0.0
    %91 = vmatprep.subr.mxu0 0.0
    %92 = vmatpush2.msra.mxu0 0.0
    %93 = vmatprep.subr.mxu0 0.0
    %94 = vmatpush2.msra.mxu0 0.0
    %95 = vmatprep.subr.mxu0 0.0
    %96 = vmatpush2.msra.mxu0 0.0
    %97 = vmatprep.subr.mxu0 0.0
    %98 = vmatpush2.msra.mxu0 0.0
    %99 = vmatprep.subr.mxu0 0.0
    %100 = vmatpush2.msra.mxu0 0.0
    %101 = vmatprep.subr.mxu0 0.0
    %102 = vmatpush2.msra.mxu0 0.0
    %103 = vmatprep.subr.mxu0 0.0
    %104 = vmatpush2.msra.mxu0 0.0
    %105 = vmatprep.subr.mxu0 0.0
    %106 = vmatpush2.msra.mxu0 0.0
    %107 = vmatprep.subr.mxu0 0.0
    %108 = vmatpush2.msra.mxu0 0.0
    %109 = vmatprep.subr.mxu0 0.0
    %110 = vmatpush2.msra.mxu0 0.0
    %111 = vmatprep.mubr.f32.mxu0 0.0
    %112 = vmatmul.mubr.f32.gmra.mxu0 %v36
    %v113 = vpop.f32.mrf.mxu0
    %v114 = vadd.f32 %v32, %v113
    %v115 = vpop.f32.mrf.mxu0
    %116 = vmatprep.mubr.f32.mxu0 0.0
    %117 = vmatmul.mubr.f32.gmra.mxu0 %v39
    %v118 = vpop.f32.mrf.mxu0
    %v119 = vadd.f32 %v32, %v118
    %v120 = vpop.f32.mrf.mxu0
    %121 = vmatprep.mubr.f32.mxu0 0.0
    %122 = vmatmul.mubr.f32.gmra.mxu0 %v42
    %v123 = vpop.f32.mrf.mxu0
    %v124 = vadd.f32 %v32, %v123
    %v125 = vpop.f32.mrf.mxu0
    %126 = vmatprep.mubr.f32.mxu0 0.0
    %127 = vmatmul.mubr.f32.gmra.mxu0 %v45
    %v128 = vpop.f32.mrf.mxu0
    %v129 = vadd.f32 %v32, %v128
    %v130 = vpop.f32.mrf.mxu0
    %131 = vdwg.mxu0
    %vm132 = vcmask 261120
    %133 = vst.msk [vmem:[#allocation2] sm:$0xff] %vm132, %v114
    %134 = vst.msk [vmem:[#allocation2 + $0x8] sm:$0xff] %vm132, %v119
    %135 = vst.msk [vmem:[#allocation2 + $0x10] sm:$0xff] %vm132, %v124
    %136 = vst.msk [vmem:[#allocation2 + $0x18] sm:$0xff] %vm132, %v129
    // Predicated region
    $region14: #{tpu_custom_call.1} parent=1 // pred_check
      _
    $region15: #{tpu_custom_call.1} parent=1 // pred_check_branch
      %138 = sbr.rel (0) target = $region17
    $region16: #{tpu_custom_call.1} parent=1 // pred_region
      %s140 = ssub.s32 512, 512
      %141 = vsyncadd [#allocation3], %s140
      %s142 = sshll.u32 [#allocation2], 4
      %s143 = int_to_ptr.vmem [resolvable:$true] %s142
      %148 = dma.vmem_to_hbm [thread:$0]  %s143, 512, %s3, [#allocation3], 128, 128, 8
    $region17: #{tpu_custom_call.1} parent=1 // pred_fallthru
      _
    // Predicated region
    $region18: #{tpu_custom_call.1} parent=1 // pred_check
      _
    $region19: #{tpu_custom_call.1} parent=1 // pred_check_branch
      %150 = sbr.rel (0) target = $region21
    $region20: #{tpu_custom_call.1} parent=1 // pred_region
      %151 = dma.done [#allocation3], 512
    $region21: #{tpu_custom_call.1} parent=1 // pred_fallthru
      _
    %152 = vsyncpa [#allocation3], 1

</llo_original>
